<compile_context>
chip_gen: v7x
topology: tpu7x:2x2x1
jax: 0.10.0
libtpu: 0.0.40
codegen_flags: <defaults>
</compile_context>

<pallas_src>
import functools

import jax
import jax.numpy as jnp
from jax import lax
from jax.experimental import pallas as pl
from jax.experimental.pallas import tpu as pltpu


def _round_up(n, m):
    return ((n + m - 1) // m) * m


def _slab_offsets(input_size, hidden_size):
    """Row offsets of each parameter inside the packed (rows, 4H) f32 slab.

    Every section starts on a sublane-group (8-row) boundary so the in-kernel
    static slices are sublane aligned.
    """
    I, H = input_size, hidden_size
    o_wih = 0
    o_whh = o_wih + _round_up(I, 8)
    o_b = o_whh + _round_up(H, 8)
    o_fcw = o_b + 8
    o_fcb = o_fcw + _round_up(H, 8)
    rows = o_fcb + 8
    return o_wih, o_whh, o_b, o_fcw, o_fcb, rows


def _make_lstm_fc_kernel(B, T, I, H):
    """Kernel factory; B/T/I/H and the slab offsets are static Python ints."""
    o_wih, o_whh, o_b, o_fcw, o_fcb, _ = _slab_offsets(I, H)

    def kernel(x_ref, p_ref, out_ref):
        # Static, sublane-aligned slices of the single packed parameter slab
        # (one DMA brought everything in).
        w_ih = p_ref[o_wih:o_wih + I, :]                        # (I, 4H) f32
        w_hh = p_ref[o_whh:o_whh + H, :].astype(jnp.bfloat16)   # (H, 4H) bf16 MXU operand
        b = p_ref[o_b:o_b + 1, :]                               # (1, 4H)
        fc_w = p_ref[o_fcw:o_fcw + H, :]                        # (H, 4H), cols >= O are 0
        fc_b = p_ref[o_fcb:o_fcb + 1, :]                        # (1, 4H), cols >= O are 0

        # Input projection for ALL timesteps in one MXU matmul (off the serial
        # chain); bias folded in once.  (T*B, I) @ (I, 4H) -> (T*B, 4H).
        xproj = jnp.dot(x_ref[...], w_ih, preferred_element_type=jnp.float32) + b

        def gate_math(gates, c_prev):
            # One full-width sigmoid (single EUP push) + tanh only on the g slice.
            sig = jax.nn.sigmoid(gates)
            i_g = sig[:, 0 * H:1 * H]
            f_g = sig[:, 1 * H:2 * H]
            o_g = sig[:, 3 * H:4 * H]
            g_g = jnp.tanh(gates[:, 2 * H:3 * H])
            c_new = f_g * c_prev + i_g * g_g
            h_new = o_g * jnp.tanh(c_new)
            return h_new, c_new

        # Peeled t = 0: h0 = c0 = 0, so there is no recurrent matmul and
        # c = i*g directly (removes one MXU push+drain + two VPU ops from the
        # serial dependency chain).
        gates0 = xproj[0:B, :]
        sig0 = jax.nn.sigmoid(gates0)
        g0 = jnp.tanh(gates0[:, 2 * H:3 * H])
        c = sig0[:, 0 * H:1 * H] * g0
        h = sig0[:, 3 * H:4 * H] * jnp.tanh(c)

        # Remaining recurrence, fully unrolled (T is small & static).  Only the
        # (B, H) @ (H, 4H) recurrent matmul is serial; operands are bf16
        # (single MXU pass on all gens), accumulation stays f32.
        # Possible further step (not taken): hold W_hh resident in the MXU via
        # pltpu.matmul_push_rhs / matmul_acc_lhs / matmul_pop across all steps.
        for t in range(1, T):
            rec = jnp.dot(h.astype(jnp.bfloat16), w_hh,
                          preferred_element_type=jnp.float32)
            h, c = gate_math(xproj[t * B:(t + 1) * B, :] + rec, c)

        # fc on the last hidden state; fc bias and the MinMaxScaler inverse
        # transform are already folded into fc_w / fc_b.  Output is lane-dense
        # (B_pad, 4H); the wrapper slices [:B, :O].
        out_ref[...] = (jnp.dot(h, fc_w, preferred_element_type=jnp.float32)
                        + fc_b)

    return kernel


@functools.partial(jax.jit, static_argnames=("hidden_size", "output_size"))
def acao_model_forward(x_bti, p_slab, *, hidden_size, output_size):
    """x_bti: (B, T, I) f32 -> (B, output_size) f32 (scaler inverse already applied)."""
    B, T, I = x_bti.shape
    H, O = hidden_size, output_size
    H4 = 4 * H

    # Pad batch to a full sublane group (8).  Padded rows are zero, the LSTM is
    # row-independent, and they are sliced off at the end.
    B_pad = _round_up(max(B, 1), 8)
    if B_pad != B:
        x_bti = jnp.pad(x_bti, ((0, B_pad - B), (0, 0), (0, 0)))

    # Time-major then flatten: (B,T,I) -> (T,B,I) -> (T*B, I) so all per-step
    # input projections become one matmul inside the kernel.
    x_flat = jnp.transpose(x_bti, (1, 0, 2)).reshape(T * B_pad, I)

    kernel = _make_lstm_fc_kernel(B_pad, T, I, H)

    # Note (v7x): with a larger batch, add a leading "parallel" grid axis over
    # batch tiles to use both TensorCores; at B_pad=8 a single invocation is right.
    out = pl.pallas_call(
        kernel,
        out_shape=jax.ShapeDtypeStruct((B_pad, H4), jnp.float32),
        grid_spec=pltpu.PrefetchScalarGridSpec(
            num_scalar_prefetch=0,
            grid=(1,),                                   # single invocation
            in_specs=[
                pl.BlockSpec((T * B_pad, I), lambda i: (0, 0)),   # flattened x
                pl.BlockSpec(p_slab.shape, lambda i: (0, 0)),     # packed params
            ],
            out_specs=pl.BlockSpec((B_pad, H4), lambda i: (0, 0)),
        ),
        compiler_params=pltpu.CompilerParams(
            dimension_semantics=("arbitrary",)),
    )(x_flat, p_slab)

    return out[:B, :O]


def make_raw_params(key, input_size, hidden_size, output_size):
    """Deterministic synthetic parameters in PyTorch nn.LSTM / nn.Linear shapes."""
    ks = jax.random.split(key, 6)
    H, I, O = hidden_size, input_size, output_size
    s = 1.0 / jnp.sqrt(H)
    w_ih = jax.random.uniform(ks[0], (4 * H, I), jnp.float32, -s, s)
    w_hh = jax.random.uniform(ks[1], (4 * H, H), jnp.float32, -s, s)
    b_ih = jax.random.uniform(ks[2], (4 * H,), jnp.float32, -s, s)
    b_hh = jax.random.uniform(ks[3], (4 * H,), jnp.float32, -s, s)
    fc_w = jax.random.uniform(ks[4], (O, H), jnp.float32, -s, s)
    fc_b = jax.random.uniform(ks[5], (O,), jnp.float32, -s, s)
    # Synthetic MinMaxScaler state (scale_, min_) — deterministic, no file load.
    # TODO(synk): real AcaoModel loads LSTM/fc weights (stock_rnn.pth) and the
    # sklearn scaler (stock_rnn_scaler.pkl) from disk.
    return {
        "w_ih": w_ih, "w_hh": w_hh, "b_ih": b_ih, "b_hh": b_hh,
        "fc_w": fc_w, "fc_b": fc_b,
        "scaler_scale": jnp.float32(0.5), "scaler_min": jnp.float32(0.1),
    }


def prepare_params(raw):
    """One-time param prep: fold fc bias + scaler inverse, pack one f32 slab."""
    w_ih, w_hh = raw["w_ih"], raw["w_hh"]          # (4H, I), (4H, H)
    H4, I = w_ih.shape
    H = H4 // 4
    O = raw["fc_w"].shape[0]
    assert O <= H4, "output_size must fit in the 4H-wide slab"
    o_wih, o_whh, o_b, o_fcw, o_fcb, rows = _slab_offsets(I, H)

    # Fold fc bias + MinMaxScaler.inverse_transform into the fc weights:
    #   (h @ W + b - min_) / scale_ == h @ (W/scale_) + (b - min_)/scale_
    fcw_eff = raw["fc_w"].T / raw["scaler_scale"]                      # (H, O)
    fcb_eff = (raw["fc_b"] - raw["scaler_min"]) / raw["scaler_scale"]  # (O,)

    slab = jnp.zeros((rows, H4), jnp.float32)
    slab = slab.at[o_wih:o_wih + I, :].set(w_ih.T)                 # W_ih^T
    slab = slab.at[o_whh:o_whh + H, :].set(w_hh.T)                 # W_hh^T
    slab = slab.at[o_b, :].set(raw["b_ih"] + raw["b_hh"])          # gate bias
    slab = slab.at[o_fcw:o_fcw + H, :O].set(fcw_eff)               # fc weight (folded)
    slab = slab.at[o_fcb, :O].set(fcb_eff)                         # fc bias (folded)
    return slab


def reference_forward(x_bti, raw, *, bf16_recurrence=False):
    """Pure-JAX reference mirroring nn.LSTM(batch_first=True) + fc + inverse_transform.

    bf16_recurrence=True mirrors the kernel's bf16 MXU operands (f32 accumulation)
    on the recurrent matmul only.
    """
    B, T, I = x_bti.shape
    H = raw["w_hh"].shape[1]
    w_ih_t = raw["w_ih"].T
    w_hh_t = raw["w_hh"].T
    b = (raw["b_ih"] + raw["b_hh"]).reshape(1, -1)
    w_hh_rec = w_hh_t.astype(jnp.bfloat16) if bf16_recurrence else w_hh_t

    h = jnp.zeros((B, H), jnp.float32)
    c = jnp.zeros((B, H), jnp.float32)

    def step(carry, x_t):
        h, c = carry
        hh = h.astype(jnp.bfloat16) if bf16_recurrence else h
        gates = (x_t @ w_ih_t
                 + jnp.dot(hh, w_hh_rec, preferred_element_type=jnp.float32)
                 + b)
        i = jax.nn.sigmoid(gates[:, 0 * H:1 * H])
        f = jax.nn.sigmoid(gates[:, 1 * H:2 * H])
        g = jnp.tanh(gates[:, 2 * H:3 * H])
        o = jax.nn.sigmoid(gates[:, 3 * H:4 * H])
        c = f * c + i * g
        h = o * jnp.tanh(c)
        return (h, c), None

    (h, c), _ = lax.scan(step, (h, c), jnp.transpose(x_bti, (1, 0, 2)))
    y = h @ raw["fc_w"].T + raw["fc_b"]
    return (y - raw["scaler_min"]) / raw["scaler_scale"]


if __name__ == "__main__":
    # Small shapes consistent with the module: AcaoModel(input, hidden, 1, output).
    B, T, I, H, O = 2, 8, 4, 32, 1

    key = jax.random.PRNGKey(0)
    k_x, k_p = jax.random.split(key)
    x = jax.random.normal(k_x, (B, T, I), dtype=jnp.float32)

    raw = make_raw_params(k_p, I, H, O)
    p_slab = prepare_params(raw)          # one-time param prep (hoisted out of forward)

    out = acao_model_forward(x, p_slab, hidden_size=H, output_size=O)
    out = jax.block_until_ready(out)
    assert out.shape == (B, O)

    # Exactness vs. a reference mirroring the kernel's bf16 MXU operands, and a
    # looser semantic check vs. the full-f32 original-module numerics.
    ref_bf16 = reference_forward(x, raw, bf16_recurrence=True)
    ref_f32 = reference_forward(x, raw, bf16_recurrence=False)
    assert jnp.allclose(out, ref_bf16, atol=1e-3, rtol=1e-3), (out, ref_bf16)
    assert jnp.allclose(out, ref_f32, atol=5e-2, rtol=5e-2), (out, ref_f32)

    print("KERNEL_OK")
</pallas_src>

<mosaic_0001>
module attributes {stable_mosaic.version = 11 : i64} {
  func.func @kernel(%arg0: i32, %arg1: memref<64x4xf32, #tpu.memory_space<vmem>>, %arg2: memref<88x128xf32, #tpu.memory_space<vmem>>, %arg3: memref<8x128xf32, #tpu.memory_space<vmem>>) attributes {dimension_semantics = [#tpu.dimension_semantics<arbitrary>], iteration_bounds = array<i64: 1>, scalar_prefetch = 0 : i64, scratch_operands = 0 : i64, tpu.core_type = #tpu.core_type<tc>, window_params = [{pipeline_mode = #tpu.pipeline_mode<synchronous>, transform_indices = @transform_0, window_bounds = array<i64: 64, 4>}, {pipeline_mode = #tpu.pipeline_mode<synchronous>, transform_indices = @transform_1, window_bounds = array<i64: 88, 128>}, {pipeline_mode = #tpu.pipeline_mode<synchronous>, transform_indices = @transform_2, window_bounds = array<i64: 8, 128>}]} {
    %c0 = arith.constant 0 : index
    %c0_0 = arith.constant 0 : index
    %0 = vector.load %arg2[%c0, %c0_0] : memref<88x128xf32, #tpu.memory_space<vmem>>, vector<4x128xf32>
    %c8 = arith.constant 8 : index
    %c0_1 = arith.constant 0 : index
    %1 = vector.load %arg2[%c8, %c0_1] : memref<88x128xf32, #tpu.memory_space<vmem>>, vector<32x128xf32>
    %2 = arith.truncf %1 : vector<32x128xf32> to vector<32x128xbf16>
    %c40 = arith.constant 40 : index
    %c0_2 = arith.constant 0 : index
    %3 = vector.load %arg2[%c40, %c0_2] : memref<88x128xf32, #tpu.memory_space<vmem>>, vector<1x128xf32>
    %c48 = arith.constant 48 : index
    %c0_3 = arith.constant 0 : index
    %4 = vector.load %arg2[%c48, %c0_3] : memref<88x128xf32, #tpu.memory_space<vmem>>, vector<32x128xf32>
    %c80 = arith.constant 80 : index
    %c0_4 = arith.constant 0 : index
    %5 = vector.load %arg2[%c80, %c0_4] : memref<88x128xf32, #tpu.memory_space<vmem>>, vector<1x128xf32>
    %c0_5 = arith.constant 0 : index
    %c0_6 = arith.constant 0 : index
    %6 = vector.load %arg1[%c0_5, %c0_6] : memref<64x4xf32, #tpu.memory_space<vmem>>, vector<64x4xf32>
    %cst = arith.constant dense<0.000000e+00> : vector<64x128xf32>
    %7 = tpu.matmul %6, %0, %cst {dimension_numbers = #tpu.dot_dimension_numbers<[1], [0], [0], [1], [0, 0, 1, 1], [], []>} : vector<64x4xf32>, vector<4x128xf32>, vector<64x128xf32> -> vector<64x128xf32>
    %8 = vector.broadcast %3 : vector<1x128xf32> to vector<64x128xf32>
    %9 = arith.addf %7, %8 : vector<64x128xf32>
    %10 = vector.extract_strided_slice %9 {offsets = [0, 0], sizes = [8, 128], strides = [1, 1]} : vector<64x128xf32> to vector<8x128xf32>
    %11 = arith.negf %10 : vector<8x128xf32>
    %12 = math.exp %11 : vector<8x128xf32>
    %cst_7 = arith.constant 1.000000e+00 : f32
    %13 = vector.broadcast %cst_7 : f32 to vector<8x128xf32>
    %14 = arith.addf %13, %12 : vector<8x128xf32>
    %15 = arith.divf %13, %14 : vector<8x128xf32>
    %16 = vector.extract_strided_slice %10 {offsets = [0, 64], sizes = [8, 32], strides = [1, 1]} : vector<8x128xf32> to vector<8x32xf32>
    %17 = math.tanh %16 : vector<8x32xf32>
    %18 = vector.extract_strided_slice %15 {offsets = [0, 0], sizes = [8, 32], strides = [1, 1]} : vector<8x128xf32> to vector<8x32xf32>
    %19 = arith.mulf %18, %17 : vector<8x32xf32>
    %20 = vector.extract_strided_slice %15 {offsets = [0, 96], sizes = [8, 32], strides = [1, 1]} : vector<8x128xf32> to vector<8x32xf32>
    %21 = math.tanh %19 : vector<8x32xf32>
    %22 = arith.mulf %20, %21 : vector<8x32xf32>
    %23 = arith.truncf %22 : vector<8x32xf32> to vector<8x32xbf16>
    %cst_8 = arith.constant dense<0.000000e+00> : vector<8x128xf32>
    %24 = tpu.matmul %23, %2, %cst_8 {dimension_numbers = #tpu.dot_dimension_numbers<[1], [0], [0], [1], [0, 0, 1, 1], [], []>} : vector<8x32xbf16>, vector<32x128xbf16>, vector<8x128xf32> -> vector<8x128xf32>
    %25 = vector.extract_strided_slice %9 {offsets = [8, 0], sizes = [8, 128], strides = [1, 1]} : vector<64x128xf32> to vector<8x128xf32>
    %26 = arith.addf %25, %24 : vector<8x128xf32>
    %27 = arith.negf %26 : vector<8x128xf32>
    %28 = math.exp %27 : vector<8x128xf32>
    %cst_9 = arith.constant 1.000000e+00 : f32
    %29 = vector.broadcast %cst_9 : f32 to vector<8x128xf32>
    %30 = arith.addf %29, %28 : vector<8x128xf32>
    %31 = arith.divf %29, %30 : vector<8x128xf32>
    %32 = vector.extract_strided_slice %31 {offsets = [0, 0], sizes = [8, 32], strides = [1, 1]} : vector<8x128xf32> to vector<8x32xf32>
    %33 = vector.extract_strided_slice %31 {offsets = [0, 32], sizes = [8, 32], strides = [1, 1]} : vector<8x128xf32> to vector<8x32xf32>
    %34 = vector.extract_strided_slice %31 {offsets = [0, 96], sizes = [8, 32], strides = [1, 1]} : vector<8x128xf32> to vector<8x32xf32>
    %35 = vector.extract_strided_slice %26 {offsets = [0, 64], sizes = [8, 32], strides = [1, 1]} : vector<8x128xf32> to vector<8x32xf32>
    %36 = math.tanh %35 : vector<8x32xf32>
    %37 = arith.mulf %33, %19 : vector<8x32xf32>
    %38 = arith.mulf %32, %36 : vector<8x32xf32>
    %39 = arith.addf %37, %38 : vector<8x32xf32>
    %40 = math.tanh %39 : vector<8x32xf32>
    %41 = arith.mulf %34, %40 : vector<8x32xf32>
    %42 = arith.truncf %41 : vector<8x32xf32> to vector<8x32xbf16>
    %cst_10 = arith.constant dense<0.000000e+00> : vector<8x128xf32>
    %43 = tpu.matmul %42, %2, %cst_10 {dimension_numbers = #tpu.dot_dimension_numbers<[1], [0], [0], [1], [0, 0, 1, 1], [], []>} : vector<8x32xbf16>, vector<32x128xbf16>, vector<8x128xf32> -> vector<8x128xf32>
    %44 = vector.extract_strided_slice %9 {offsets = [16, 0], sizes = [8, 128], strides = [1, 1]} : vector<64x128xf32> to vector<8x128xf32>
    %45 = arith.addf %44, %43 : vector<8x128xf32>
    %46 = arith.negf %45 : vector<8x128xf32>
    %47 = math.exp %46 : vector<8x128xf32>
    %cst_11 = arith.constant 1.000000e+00 : f32
    %48 = vector.broadcast %cst_11 : f32 to vector<8x128xf32>
    %49 = arith.addf %48, %47 : vector<8x128xf32>
    %50 = arith.divf %48, %49 : vector<8x128xf32>
    %51 = vector.extract_strided_slice %50 {offsets = [0, 0], sizes = [8, 32], strides = [1, 1]} : vector<8x128xf32> to vector<8x32xf32>
    %52 = vector.extract_strided_slice %50 {offsets = [0, 32], sizes = [8, 32], strides = [1, 1]} : vector<8x128xf32> to vector<8x32xf32>
    %53 = vector.extract_strided_slice %50 {offsets = [0, 96], sizes = [8, 32], strides = [1, 1]} : vector<8x128xf32> to vector<8x32xf32>
    %54 = vector.extract_strided_slice %45 {offsets = [0, 64], sizes = [8, 32], strides = [1, 1]} : vector<8x128xf32> to vector<8x32xf32>
    %55 = math.tanh %54 : vector<8x32xf32>
    %56 = arith.mulf %52, %39 : vector<8x32xf32>
    %57 = arith.mulf %51, %55 : vector<8x32xf32>
    %58 = arith.addf %56, %57 : vector<8x32xf32>
    %59 = math.tanh %58 : vector<8x32xf32>
    %60 = arith.mulf %53, %59 : vector<8x32xf32>
    %61 = arith.truncf %60 : vector<8x32xf32> to vector<8x32xbf16>
    %cst_12 = arith.constant dense<0.000000e+00> : vector<8x128xf32>
    %62 = tpu.matmul %61, %2, %cst_12 {dimension_numbers = #tpu.dot_dimension_numbers<[1], [0], [0], [1], [0, 0, 1, 1], [], []>} : vector<8x32xbf16>, vector<32x128xbf16>, vector<8x128xf32> -> vector<8x128xf32>
    %63 = vector.extract_strided_slice %9 {offsets = [24, 0], sizes = [8, 128], strides = [1, 1]} : vector<64x128xf32> to vector<8x128xf32>
    %64 = arith.addf %63, %62 : vector<8x128xf32>
    %65 = arith.negf %64 : vector<8x128xf32>
    %66 = math.exp %65 : vector<8x128xf32>
    %cst_13 = arith.constant 1.000000e+00 : f32
    %67 = vector.broadcast %cst_13 : f32 to vector<8x128xf32>
    %68 = arith.addf %67, %66 : vector<8x128xf32>
    %69 = arith.divf %67, %68 : vector<8x128xf32>
    %70 = vector.extract_strided_slice %69 {offsets = [0, 0], sizes = [8, 32], strides = [1, 1]} : vector<8x128xf32> to vector<8x32xf32>
    %71 = vector.extract_strided_slice %69 {offsets = [0, 32], sizes = [8, 32], strides = [1, 1]} : vector<8x128xf32> to vector<8x32xf32>
    %72 = vector.extract_strided_slice %69 {offsets = [0, 96], sizes = [8, 32], strides = [1, 1]} : vector<8x128xf32> to vector<8x32xf32>
    %73 = vector.extract_strided_slice %64 {offsets = [0, 64], sizes = [8, 32], strides = [1, 1]} : vector<8x128xf32> to vector<8x32xf32>
    %74 = math.tanh %73 : vector<8x32xf32>
    %75 = arith.mulf %71, %58 : vector<8x32xf32>
    %76 = arith.mulf %70, %74 : vector<8x32xf32>
    %77 = arith.addf %75, %76 : vector<8x32xf32>
    %78 = math.tanh %77 : vector<8x32xf32>
    %79 = arith.mulf %72, %78 : vector<8x32xf32>
    %80 = arith.truncf %79 : vector<8x32xf32> to vector<8x32xbf16>
    %cst_14 = arith.constant dense<0.000000e+00> : vector<8x128xf32>
    %81 = tpu.matmul %80, %2, %cst_14 {dimension_numbers = #tpu.dot_dimension_numbers<[1], [0], [0], [1], [0, 0, 1, 1], [], []>} : vector<8x32xbf16>, vector<32x128xbf16>, vector<8x128xf32> -> vector<8x128xf32>
    %82 = vector.extract_strided_slice %9 {offsets = [32, 0], sizes = [8, 128], strides = [1, 1]} : vector<64x128xf32> to vector<8x128xf32>
    %83 = arith.addf %82, %81 : vector<8x128xf32>
    %84 = arith.negf %83 : vector<8x128xf32>
    %85 = math.exp %84 : vector<8x128xf32>
    %cst_15 = arith.constant 1.000000e+00 : f32
    %86 = vector.broadcast %cst_15 : f32 to vector<8x128xf32>
    %87 = arith.addf %86, %85 : vector<8x128xf32>
    %88 = arith.divf %86, %87 : vector<8x128xf32>
    %89 = vector.extract_strided_slice %88 {offsets = [0, 0], sizes = [8, 32], strides = [1, 1]} : vector<8x128xf32> to vector<8x32xf32>
    %90 = vector.extract_strided_slice %88 {offsets = [0, 32], sizes = [8, 32], strides = [1, 1]} : vector<8x128xf32> to vector<8x32xf32>
    %91 = vector.extract_strided_slice %88 {offsets = [0, 96], sizes = [8, 32], strides = [1, 1]} : vector<8x128xf32> to vector<8x32xf32>
    %92 = vector.extract_strided_slice %83 {offsets = [0, 64], sizes = [8, 32], strides = [1, 1]} : vector<8x128xf32> to vector<8x32xf32>
    %93 = math.tanh %92 : vector<8x32xf32>
    %94 = arith.mulf %90, %77 : vector<8x32xf32>
    %95 = arith.mulf %89, %93 : vector<8x32xf32>
    %96 = arith.addf %94, %95 : vector<8x32xf32>
    %97 = math.tanh %96 : vector<8x32xf32>
    %98 = arith.mulf %91, %97 : vector<8x32xf32>
    %99 = arith.truncf %98 : vector<8x32xf32> to vector<8x32xbf16>
    %cst_16 = arith.constant dense<0.000000e+00> : vector<8x128xf32>
    %100 = tpu.matmul %99, %2, %cst_16 {dimension_numbers = #tpu.dot_dimension_numbers<[1], [0], [0], [1], [0, 0, 1, 1], [], []>} : vector<8x32xbf16>, vector<32x128xbf16>, vector<8x128xf32> -> vector<8x128xf32>
    %101 = vector.extract_strided_slice %9 {offsets = [40, 0], sizes = [8, 128], strides = [1, 1]} : vector<64x128xf32> to vector<8x128xf32>
    %102 = arith.addf %101, %100 : vector<8x128xf32>
    %103 = arith.negf %102 : vector<8x128xf32>
    %104 = math.exp %103 : vector<8x128xf32>
    %cst_17 = arith.constant 1.000000e+00 : f32
    %105 = vector.broadcast %cst_17 : f32 to vector<8x128xf32>
    %106 = arith.addf %105, %104 : vector<8x128xf32>
    %107 = arith.divf %105, %106 : vector<8x128xf32>
    %108 = vector.extract_strided_slice %107 {offsets = [0, 0], sizes = [8, 32], strides = [1, 1]} : vector<8x128xf32> to vector<8x32xf32>
    %109 = vector.extract_strided_slice %107 {offsets = [0, 32], sizes = [8, 32], strides = [1, 1]} : vector<8x128xf32> to vector<8x32xf32>
    %110 = vector.extract_strided_slice %107 {offsets = [0, 96], sizes = [8, 32], strides = [1, 1]} : vector<8x128xf32> to vector<8x32xf32>
    %111 = vector.extract_strided_slice %102 {offsets = [0, 64], sizes = [8, 32], strides = [1, 1]} : vector<8x128xf32> to vector<8x32xf32>
    %112 = math.tanh %111 : vector<8x32xf32>
    %113 = arith.mulf %109, %96 : vector<8x32xf32>
    %114 = arith.mulf %108, %112 : vector<8x32xf32>
    %115 = arith.addf %113, %114 : vector<8x32xf32>
    %116 = math.tanh %115 : vector<8x32xf32>
    %117 = arith.mulf %110, %116 : vector<8x32xf32>
    %118 = arith.truncf %117 : vector<8x32xf32> to vector<8x32xbf16>
    %cst_18 = arith.constant dense<0.000000e+00> : vector<8x128xf32>
    %119 = tpu.matmul %118, %2, %cst_18 {dimension_numbers = #tpu.dot_dimension_numbers<[1], [0], [0], [1], [0, 0, 1, 1], [], []>} : vector<8x32xbf16>, vector<32x128xbf16>, vector<8x128xf32> -> vector<8x128xf32>
    %120 = vector.extract_strided_slice %9 {offsets = [48, 0], sizes = [8, 128], strides = [1, 1]} : vector<64x128xf32> to vector<8x128xf32>
    %121 = arith.addf %120, %119 : vector<8x128xf32>
    %122 = arith.negf %121 : vector<8x128xf32>
    %123 = math.exp %122 : vector<8x128xf32>
    %cst_19 = arith.constant 1.000000e+00 : f32
    %124 = vector.broadcast %cst_19 : f32 to vector<8x128xf32>
    %125 = arith.addf %124, %123 : vector<8x128xf32>
    %126 = arith.divf %124, %125 : vector<8x128xf32>
    %127 = vector.extract_strided_slice %126 {offsets = [0, 0], sizes = [8, 32], strides = [1, 1]} : vector<8x128xf32> to vector<8x32xf32>
    %128 = vector.extract_strided_slice %126 {offsets = [0, 32], sizes = [8, 32], strides = [1, 1]} : vector<8x128xf32> to vector<8x32xf32>
    %129 = vector.extract_strided_slice %126 {offsets = [0, 96], sizes = [8, 32], strides = [1, 1]} : vector<8x128xf32> to vector<8x32xf32>
    %130 = vector.extract_strided_slice %121 {offsets = [0, 64], sizes = [8, 32], strides = [1, 1]} : vector<8x128xf32> to vector<8x32xf32>
    %131 = math.tanh %130 : vector<8x32xf32>
    %132 = arith.mulf %128, %115 : vector<8x32xf32>
    %133 = arith.mulf %127, %131 : vector<8x32xf32>
    %134 = arith.addf %132, %133 : vector<8x32xf32>
    %135 = math.tanh %134 : vector<8x32xf32>
    %136 = arith.mulf %129, %135 : vector<8x32xf32>
    %137 = arith.truncf %136 : vector<8x32xf32> to vector<8x32xbf16>
    %cst_20 = arith.constant dense<0.000000e+00> : vector<8x128xf32>
    %138 = tpu.matmul %137, %2, %cst_20 {dimension_numbers = #tpu.dot_dimension_numbers<[1], [0], [0], [1], [0, 0, 1, 1], [], []>} : vector<8x32xbf16>, vector<32x128xbf16>, vector<8x128xf32> -> vector<8x128xf32>
    %139 = vector.extract_strided_slice %9 {offsets = [56, 0], sizes = [8, 128], strides = [1, 1]} : vector<64x128xf32> to vector<8x128xf32>
    %140 = arith.addf %139, %138 : vector<8x128xf32>
    %141 = arith.negf %140 : vector<8x128xf32>
    %142 = math.exp %141 : vector<8x128xf32>
    %cst_21 = arith.constant 1.000000e+00 : f32
    %143 = vector.broadcast %cst_21 : f32 to vector<8x128xf32>
    %144 = arith.addf %143, %142 : vector<8x128xf32>
    %145 = arith.divf %143, %144 : vector<8x128xf32>
    %146 = vector.extract_strided_slice %145 {offsets = [0, 0], sizes = [8, 32], strides = [1, 1]} : vector<8x128xf32> to vector<8x32xf32>
    %147 = vector.extract_strided_slice %145 {offsets = [0, 32], sizes = [8, 32], strides = [1, 1]} : vector<8x128xf32> to vector<8x32xf32>
    %148 = vector.extract_strided_slice %145 {offsets = [0, 96], sizes = [8, 32], strides = [1, 1]} : vector<8x128xf32> to vector<8x32xf32>
    %149 = vector.extract_strided_slice %140 {offsets = [0, 64], sizes = [8, 32], strides = [1, 1]} : vector<8x128xf32> to vector<8x32xf32>
    %150 = math.tanh %149 : vector<8x32xf32>
    %151 = arith.mulf %147, %134 : vector<8x32xf32>
    %152 = arith.mulf %146, %150 : vector<8x32xf32>
    %153 = arith.addf %151, %152 : vector<8x32xf32>
    %154 = math.tanh %153 : vector<8x32xf32>
    %155 = arith.mulf %148, %154 : vector<8x32xf32>
    %cst_22 = arith.constant dense<0.000000e+00> : vector<8x128xf32>
    %156 = tpu.matmul %155, %4, %cst_22 {dimension_numbers = #tpu.dot_dimension_numbers<[1], [0], [0], [1], [0, 0, 1, 1], [], []>} : vector<8x32xf32>, vector<32x128xf32>, vector<8x128xf32> -> vector<8x128xf32>
    %157 = vector.broadcast %5 : vector<1x128xf32> to vector<8x128xf32>
    %158 = arith.addf %156, %157 : vector<8x128xf32>
    %c0_23 = arith.constant 0 : index
    %c0_24 = arith.constant 0 : index
    %159 = vector.load %arg3[%c0_23, %c0_24] : memref<8x128xf32, #tpu.memory_space<vmem>>, vector<8x128xf32>
    tpu.vector_store %arg3[%c0_23, %c0_24], %158 {strides = array<i32>} : memref<8x128xf32, #tpu.memory_space<vmem>>, vector<8x128xf32>,
    return
  }
  func.func @transform_0(%arg0: i32) -> (i32, i32) {
    %c0_i32 = arith.constant 0 : i32
    %c0_i32_0 = arith.constant 0 : i32
    %c0_i32_1 = arith.constant 0 : i32
    return %c0_i32, %c0_i32_0 : i32, i32
  }
  func.func @transform_1(%arg0: i32) -> (i32, i32) {
    %c0_i32 = arith.constant 0 : i32
    %c0_i32_0 = arith.constant 0 : i32
    %c0_i32_1 = arith.constant 0 : i32
    return %c0_i32, %c0_i32_0 : i32, i32
  }
  func.func @transform_2(%arg0: i32) -> (i32, i32) {
    %c0_i32 = arith.constant 0 : i32
    %c0_i32_0 = arith.constant 0 : i32
    %c0_i32_1 = arith.constant 0 : i32
    return %c0_i32, %c0_i32_0 : i32, i32
  }
}

</mosaic_0001>

<llo_original>
// kernel: acao_model_forward.1
$region0: #{acao_model_forward.1}
  #allocation0 [shape = 'u32[]', space=smem, size = 0x4, offset = 0x4, fixed_abs, tag = 'smem constant byte address 0x4 - core index']
  #allocation1 [shape = 'u32[144,128]{1,0:T(1,128)}', space=vmem, size = 0x12000, scoped, tag = 'internal scratch']
  %s0 = inlined_call_operand.vmem [shape: f32[64,4], index: 0, kind: input, shape index: {}]
  %s1 = inlined_call_operand.vmem [shape: f32[88,128], index: 1, kind: input, shape index: {}]
  %s2 = inlined_call_operand.vmem [shape: f32[8,128], index: 2, kind: output, shape index: {}]
  %s3 = sld [smem:[#allocation0]]
  $region18: #{acao_model_forward.1} parent=0
    _
  %s5 = ssub.s32 1, %s3
  %s6 = scalar_select 0, %s5, %s3
  // Predicated region
  $region2: #{acao_model_forward.1} parent=0 // pred_check
    _
  $region3: #{acao_model_forward.1} parent=0 // pred_check_branch
    %8 = sbr.rel (0) target = $region5
  $region4: #{acao_model_forward.1} parent=0 // pred_region
    _
  $region5: #{acao_model_forward.1} parent=0 // pred_fallthru
    _
  // Predicated region
  $region6: #{acao_model_forward.1} parent=0 // pred_check
    _
  $region7: #{acao_model_forward.1} parent=0 // pred_check_branch
    %10 = sbr.rel (0) target = $region9
  $region8: #{acao_model_forward.1} parent=0 // pred_region
    _
  $region9: #{acao_model_forward.1} parent=0 // pred_fallthru
    _
  %v12 = vld [vmem:[%s1] sm:$0xf]
  %v13 = vld [vmem:[%s1 + $0x8] sm:$0xff]
  %v14 = vld [vmem:[%s1 + $0x10] sm:$0xff]
  %v15 = vld [vmem:[%s1 + $0x18] sm:$0xff]
  %v16 = vld [vmem:[%s1 + $0x20] sm:$0xff]
  %v17 = vpack.c.bf16 %v14, %v13
  %v18 = vpack.c.bf16 %v16, %v15
  %v19 = vld [vmem:[%s1 + $0x28] sm:$0x1]
  %v20 = vld [vmem:[%s1 + $0x30] sm:$0xff]
  %v21 = vld [vmem:[%s1 + $0x38] sm:$0xff]
  %v22 = vld [vmem:[%s1 + $0x40] sm:$0xff]
  %v23 = vld [vmem:[%s1 + $0x48] sm:$0xff]
  %v24 = vld [vmem:[%s1 + $0x50] sm:$0x1]
  %v25 = vld [vmem:[%s0] sm:$0xff]
  %v26 = vld [vmem:[%s0 + $0x8] sm:$0xff]
  %v27 = vld [vmem:[%s0 + $0x10] sm:$0xff]
  %v28 = vld [vmem:[%s0 + $0x18] sm:$0xff]
  %v29 = vld [vmem:[%s0 + $0x20] sm:$0xff]
  %v30 = vld [vmem:[%s0 + $0x28] sm:$0xff]
  %v31 = vld [vmem:[%s0 + $0x30] sm:$0xff]
  %v32 = vld [vmem:[%s0 + $0x38] sm:$0xff]
  %v33 = vlaneseq
  %v34 = vshrl.u32 %v33, 7
  %v35 = vsub.s32 0, %v34
  %v36 = vrot.slane %v19, %v35
  %vm37 = vcmask 31744
  %v39 = vsel %vm37, %v25, 0
  %v42 = vsel %vm37, %v26, 0
  %v45 = vsel %vm37, %v27, 0
  %v48 = vsel %vm37, %v28, 0
  %v51 = vsel %vm37, %v29, 0
  %v54 = vsel %vm37, %v30, 0
  %v57 = vsel %vm37, %v31, 0
  %v60 = vsel %vm37, %v32, 0
  %vm62 = vcmask 1043456
  %v64 = vsel %vm62, %v12, 0
  %66 = vmatprep.subr.mxu0 0.0
  %67 = vmatpush1.msra.mxu0 %v64
  %68 = vmatprep.subr.mxu0 0.0
  %69 = vmatpush1.msra.mxu0 0.0
  %70 = vmatprep.subr.mxu0 0.0
  %71 = vmatpush1.msra.mxu0 0.0
  %72 = vmatprep.subr.mxu0 0.0
  %73 = vmatpush1.msra.mxu0 0.0
  %74 = vmatprep.subr.mxu0 0.0
  %75 = vmatpush1.msra.mxu0 0.0
  %76 = vmatprep.subr.mxu0 0.0
  %77 = vmatpush1.msra.mxu0 0.0
  %78 = vmatprep.subr.mxu0 0.0
  %79 = vmatpush1.msra.mxu0 0.0
  %80 = vmatprep.subr.mxu0 0.0
  %81 = vmatpush1.msra.mxu0 0.0
  %82 = vmatprep.subr.mxu0 0.0
  %83 = vmatpush1.msra.mxu0 0.0
  %84 = vmatprep.subr.mxu0 0.0
  %85 = vmatpush1.msra.mxu0 0.0
  %86 = vmatprep.subr.mxu0 0.0
  %87 = vmatpush1.msra.mxu0 0.0
  %88 = vmatprep.subr.mxu0 0.0
  %89 = vmatpush1.msra.mxu0 0.0
  %90 = vmatprep.subr.mxu0 0.0
  %91 = vmatpush1.msra.mxu0 0.0
  %92 = vmatprep.subr.mxu0 0.0
  %93 = vmatpush1.msra.mxu0 0.0
  %94 = vmatprep.subr.mxu0 0.0
  %95 = vmatpush1.msra.mxu0 0.0
  %96 = vmatprep.subr.mxu0 0.0
  %97 = vmatpush1.msra.mxu0 0.0
  %98 = vmatprep.subr.mxu0 0.0
  %99 = vmatpush1.msra.mxu0 0.0
  %100 = vmatprep.subr.mxu0 0.0
  %101 = vmatpush1.msra.mxu0 0.0
  %102 = vmatprep.subr.mxu0 0.0
  %103 = vmatpush1.msra.mxu0 0.0
  %104 = vmatprep.subr.mxu0 0.0
  %105 = vmatpush1.msra.mxu0 0.0
  %106 = vmatprep.subr.mxu0 0.0
  %107 = vmatpush1.msra.mxu0 0.0
  %108 = vmatprep.subr.mxu0 0.0
  %109 = vmatpush1.msra.mxu0 0.0
  %110 = vmatprep.subr.mxu0 0.0
  %111 = vmatpush1.msra.mxu0 0.0
  %112 = vmatprep.subr.mxu0 0.0
  %113 = vmatpush1.msra.mxu0 0.0
  %114 = vmatprep.subr.mxu0 0.0
  %115 = vmatpush1.msra.mxu0 0.0
  %116 = vmatprep.subr.mxu0 0.0
  %117 = vmatpush1.msra.mxu0 0.0
  %118 = vmatprep.subr.mxu0 0.0
  %119 = vmatpush1.msra.mxu0 0.0
  %120 = vmatprep.subr.mxu0 0.0
  %121 = vmatpush1.msra.mxu0 0.0
  %122 = vmatprep.subr.mxu0 0.0
  %123 = vmatpush1.msra.mxu0 0.0
  %124 = vmatprep.subr.mxu0 0.0
  %125 = vmatpush1.msra.mxu0 0.0
  %126 = vmatprep.subr.mxu0 0.0
  %127 = vmatpush1.msra.mxu0 0.0
  %128 = vmatprep.subr.mxu0 0.0
  %129 = vmatpush1.msra.mxu0 0.0
  %130 = vmatprep.mubr.f32.mxu0 0.0
  %131 = vmatmul.mubr.f32.gmra.mrb[0].mxu0 %v39
  %v132 = vpop.f32.mrb[0].mxu0
  %v133 = vadd.f32 %v36, %v132
  %v134 = vpop.f32.mrb[0].mxu0
  %135 = vmatprep.mubr.f32.mxu0 0.0
  %136 = vmatmul.mubr.f32.gmra.mrb[0].mxu0 %v42
  %v137 = vpop.f32.mrb[0].mxu0
  %v138 = vadd.f32 %v36, %v137
  %v139 = vpop.f32.mrb[0].mxu0
  %140 = vmatprep.mubr.f32.mxu0 0.0
  %141 = vmatmul.mubr.f32.gmra.mrb[0].mxu0 %v45
  %v142 = vpop.f32.mrb[0].mxu0
  %v143 = vadd.f32 %v36, %v142
  %v144 = vpop.f32.mrb[0].mxu0
  %145 = vmatprep.mubr.f32.mxu0 0.0
  %146 = vmatmul.mubr.f32.gmra.mrb[0].mxu0 %v48
  %v147 = vpop.f32.mrb[0].mxu0
  %v148 = vadd.f32 %v36, %v147
  %v149 = vpop.f32.mrb[0].mxu0
  %150 = vmatprep.mubr.f32.mxu0 0.0
  %151 = vmatmul.mubr.f32.gmra.mrb[0].mxu0 %v51
  %v152 = vpop.f32.mrb[0].mxu0
  %v153 = vadd.f32 %v36, %v152
  %v154 = vpop.f32.mrb[0].mxu0
  %155 = vmatprep.mubr.f32.mxu0 0.0
  %156 = vmatmul.mubr.f32.gmra.mrb[0].mxu0 %v54
  %v157 = vpop.f32.mrb[0].mxu0
  %v158 = vadd.f32 %v36, %v157
  %v159 = vpop.f32.mrb[0].mxu0
  %160 = vmatprep.mubr.f32.mxu0 0.0
  %161 = vmatmul.mubr.f32.gmra.mrb[0].mxu0 %v57
  %v162 = vpop.f32.mrb[0].mxu0
  %v163 = vadd.f32 %v36, %v162
  %v164 = vpop.f32.mrb[0].mxu0
  %165 = vmatprep.mubr.f32.mxu0 0.0
  %166 = vmatmul.mubr.f32.gmra.mrb[0].mxu0 %v60
  %v167 = vpop.f32.mrb[0].mxu0
  %v168 = vadd.f32 %v36, %v167
  %v169 = vpop.f32.mrb[0].mxu0
  %170 = vdwg.mxu0
  %v171 = vxor.u32 %v133, 2147483648
  %v172 = vmul.f32 %v171, 1.442695
  %v173 = vpow.pop %v172
  %v174 = vadd.f32 %v173, 1.0
  %v175 = vrcp.pop %v174
  %v176 = vmul.f32 1.0, %v175
  %v177 = vtanh.pop %v133
  %179 = vrot.lane.b32.xlu0 %v177, 64
  %v180 = vpop.permute.xlu0 %179
  %v182 = vmul.f32 %v176, %v180
  %v183 = vtanh.pop %v182
  %185 = vrot.lane.b32.xlu0 %v183, 96
  %v186 = vpop.permute.xlu0 %185
  %v188 = vmul.f32 %v176, %v186
  %v189 = vpack.c.bf16 %v188, %v188
  %191 = vrot.lane.b32.xlu0 %v189, 32
  %v192 = vpop.permute.xlu0 %191
  %vm193 = vcmask 261120
  %v195 = vsel %vm193, %v192, 0
  %197 = vmatprep.subr.bf16.mxu0 0
  %198 = vmatpush1.bf16.msra.mxu0 %v17
  %199 = vmatprep.subr.bf16.mxu0 0
  %200 = vmatpush1.bf16.msra.mxu0 %v18
  %201 = vmatprep.subr.bf16.mxu0 0
  %202 = vmatpush1.bf16.msra.mxu0 0
  %203 = vmatprep.subr.bf16.mxu0 0
  %204 = vmatpush1.bf16.msra.mxu0 0
  %205 = vmatprep.subr.bf16.mxu0 0
  %206 = vmatpush1.bf16.msra.mxu0 0
  %207 = vmatprep.subr.bf16.mxu0 0
  %208 = vmatpush1.bf16.msra.mxu0 0
  %209 = vmatprep.subr.bf16.mxu0 0
  %210 = vmatpush1.bf16.msra.mxu0 0
  %211 = vmatprep.subr.bf16.mxu0 0
  %212 = vmatpush1.bf16.msra.mxu0 0
  %213 = vmatprep.subr.bf16.mxu0 0
  %214 = vmatpush1.bf16.msra.mxu0 0
  %215 = vmatprep.subr.bf16.mxu0 0
  %216 = vmatpush1.bf16.msra.mxu0 0
  %217 = vmatprep.subr.bf16.mxu0 0
  %218 = vmatpush1.bf16.msra.mxu0 0
  %219 = vmatprep.subr.bf16.mxu0 0
  %220 = vmatpush1.bf16.msra.mxu0 0
  %221 = vmatprep.subr.bf16.mxu0 0
  %222 = vmatpush1.bf16.msra.mxu0 0
  %223 = vmatprep.subr.bf16.mxu0 0
  %224 = vmatpush1.bf16.msra.mxu0 0
  %225 = vmatprep.subr.bf16.mxu0 0
  %226 = vmatpush1.bf16.msra.mxu0 0
  %227 = vmatprep.subr.bf16.mxu0 0
  %228 = vmatpush1.bf16.msra.mxu0 0
  %229 = vmatprep.mubr.bf16.mxu0 0
  %230 = vmatmul.mubr.bf16.gmra.mrb[0].mxu0 %v195
  %v231 = vpop.f32.mrb[0].mxu0
  %v232 = vadd.f32 0.0, %v231
  %v233 = vpop.f32.mrb[0].mxu0
  %v234 = vpop.f32.mrb[0].mxu0
  %v235 = vpop.f32.mrb[0].mxu0
  %236 = vdwg.mxu0
  %v237 = vadd.f32 %v138, %v232
  %v238 = vxor.u32 %v237, 2147483648
  %v239 = vmul.f32 %v238, 1.442695
  %v240 = vpow.pop %v239
  %v241 = vadd.f32 %v240, 1.0
  %v242 = vrcp.pop %v241
  %v243 = vmul.f32 1.0, %v242
  %v244 = vtanh.pop %v237
  %246 = vrot.lane.b32.xlu0 %v182, 32
  %v247 = vpop.permute.xlu0 %246
  %v249 = vmul.f32 %v243, %v247
  %251 = vrot.lane.b32.xlu0 %v244, 64
  %v252 = vpop.permute.xlu0 %251
  %v254 = vmul.f32 %v243, %v252
  %256 = vrot.lane.b32.xlu0 %v254, 32
  %v257 = vpop.permute.xlu0 %256
  %v259 = vadd.f32 %v249, %v257
  %v260 = vtanh.pop %v259
  %262 = vrot.lane.b32.xlu0 %v260, 64
  %v263 = vpop.permute.xlu0 %262
  %v265 = vmul.f32 %v243, %v263
  %v266 = vpack.c.bf16 %v265, %v265
  %268 = vrot.lane.b32.xlu0 %v266, 32
  %v269 = vpop.permute.xlu0 %268
  %v271 = vsel %vm193, %v269, 0
  %273 = vmatprep.subr.bf16.mxu0 0
  %274 = vmatpush1.bf16.msra.mxu0 %v17
  %275 = vmatprep.subr.bf16.mxu0 0
  %276 = vmatpush1.bf16.msra.mxu0 %v18
  %277 = vmatprep.subr.bf16.mxu0 0
  %278 = vmatpush1.bf16.msra.mxu0 0
  %279 = vmatprep.subr.bf16.mxu0 0
  %280 = vmatpush1.bf16.msra.mxu0 0
  %281 = vmatprep.subr.bf16.mxu0 0
  %282 = vmatpush1.bf16.msra.mxu0 0
  %283 = vmatprep.subr.bf16.mxu0 0
  %284 = vmatpush1.bf16.msra.mxu0 0
  %285 = vmatprep.subr.bf16.mxu0 0
  %286 = vmatpush1.bf16.msra.mxu0 0
  %287 = vmatprep.subr.bf16.mxu0 0
  %288 = vmatpush1.bf16.msra.mxu0 0
  %289 = vmatprep.subr.bf16.mxu0 0
  %290 = vmatpush1.bf16.msra.mxu0 0
  %291 = vmatprep.subr.bf16.mxu0 0
  %292 = vmatpush1.bf16.msra.mxu0 0
  %293 = vmatprep.subr.bf16.mxu0 0
  %294 = vmatpush1.bf16.msra.mxu0 0
  %295 = vmatprep.subr.bf16.mxu0 0
  %296 = vmatpush1.bf16.msra.mxu0 0
  %297 = vmatprep.subr.bf16.mxu0 0
  %298 = vmatpush1.bf16.msra.mxu0 0
  %299 = vmatprep.subr.bf16.mxu0 0
  %300 = vmatpush1.bf16.msra.mxu0 0
  %301 = vmatprep.subr.bf16.mxu0 0
  %302 = vmatpush1.bf16.msra.mxu0 0
  %303 = vmatprep.subr.bf16.mxu0 0
  %304 = vmatpush1.bf16.msra.mxu0 0
  %305 = vmatprep.mubr.bf16.mxu0 0
  %306 = vmatmul.mubr.bf16.gmra.mrb[0].mxu0 %v271
  %v307 = vpop.f32.mrb[0].mxu0
  %v308 = vadd.f32 0.0, %v307
  %v309 = vpop.f32.mrb[0].mxu0
  %v310 = vpop.f32.mrb[0].mxu0
  %v311 = vpop.f32.mrb[0].mxu0
  %312 = vdwg.mxu0
  %v313 = vadd.f32 %v143, %v308
  %v314 = vxor.u32 %v313, 2147483648
  %v315 = vmul.f32 %v314, 1.442695
  %v316 = vpow.pop %v315
  %v317 = vadd.f32 %v316, 1.0
  %v318 = vrcp.pop %v317
  %v319 = vmul.f32 1.0, %v318
  %v320 = vtanh.pop %v313
  %v321 = vmul.f32 %v319, %v259
  %323 = vrot.lane.b32.xlu0 %v320, 64
  %v324 = vpop.permute.xlu0 %323
  %v326 = vmul.f32 %v319, %v324
  %328 = vrot.lane.b32.xlu0 %v326, 32
  %v329 = vpop.permute.xlu0 %328
  %v331 = vadd.f32 %v321, %v329
  %v332 = vtanh.pop %v331
  %334 = vrot.lane.b32.xlu0 %v332, 64
  %v335 = vpop.permute.xlu0 %334
  %v337 = vmul.f32 %v319, %v335
  %v338 = vpack.c.bf16 %v337, %v337
  %340 = vrot.lane.b32.xlu0 %v338, 32
  %v341 = vpop.permute.xlu0 %340
  %v343 = vsel %vm193, %v341, 0
  %345 = vmatprep.subr.bf16.mxu0 0
  %346 = vmatpush1.bf16.msra.mxu0 %v17
  %347 = vmatprep.subr.bf16.mxu0 0
  %348 = vmatpush1.bf16.msra.mxu0 %v18
  %349 = vmatprep.subr.bf16.mxu0 0
  %350 = vmatpush1.bf16.msra.mxu0 0
  %351 = vmatprep.subr.bf16.mxu0 0
  %352 = vmatpush1.bf16.msra.mxu0 0
  %353 = vmatprep.subr.bf16.mxu0 0
  %354 = vmatpush1.bf16.msra.mxu0 0
  %355 = vmatprep.subr.bf16.mxu0 0
  %356 = vmatpush1.bf16.msra.mxu0 0
  %357 = vmatprep.subr.bf16.mxu0 0
  %358 = vmatpush1.bf16.msra.mxu0 0
  %359 = vmatprep.subr.bf16.mxu0 0
  %360 = vmatpush1.bf16.msra.mxu0 0
  %361 = vmatprep.subr.bf16.mxu0 0
  %362 = vmatpush1.bf16.msra.mxu0 0
  %363 = vmatprep.subr.bf16.mxu0 0
  %364 = vmatpush1.bf16.msra.mxu0 0
  %365 = vmatprep.subr.bf16.mxu0 0
  %366 = vmatpush1.bf16.msra.mxu0 0
  %367 = vmatprep.subr.bf16.mxu0 0
  %368 = vmatpush1.bf16.msra.mxu0 0
  %369 = vmatprep.subr.bf16.mxu0 0
  %370 = vmatpush1.bf16.msra.mxu0 0
  %371 = vmatprep.subr.bf16.mxu0 0
  %372 = vmatpush1.bf16.msra.mxu0 0
  %373 = vmatprep.subr.bf16.mxu0 0
  %374 = vmatpush1.bf16.msra.mxu0 0
  %375 = vmatprep.subr.bf16.mxu0 0
  %376 = vmatpush1.bf16.msra.mxu0 0
  %377 = vmatprep.mubr.bf16.mxu0 0
  %378 = vmatmul.mubr.bf16.gmra.mrb[0].mxu0 %v343
  %v379 = vpop.f32.mrb[0].mxu0
  %v380 = vadd.f32 0.0, %v379
  %v381 = vpop.f32.mrb[0].mxu0
  %v382 = vpop.f32.mrb[0].mxu0
  %v383 = vpop.f32.mrb[0].mxu0
  %384 = vdwg.mxu0
  %v385 = vadd.f32 %v148, %v380
  %v386 = vxor.u32 %v385, 2147483648
  %v387 = vmul.f32 %v386, 1.442695
  %v388 = vpow.pop %v387
  %v389 = vadd.f32 %v388, 1.0
  %v390 = vrcp.pop %v389
  %v391 = vmul.f32 1.0, %v390
  %v392 = vtanh.pop %v385
  %v393 = vmul.f32 %v391, %v331
  %395 = vrot.lane.b32.xlu0 %v392, 64
  %v396 = vpop.permute.xlu0 %395
  %v398 = vmul.f32 %v391, %v396
  %400 = vrot.lane.b32.xlu0 %v398, 32
  %v401 = vpop.permute.xlu0 %400
  %v403 = vadd.f32 %v393, %v401
  %v404 = vtanh.pop %v403
  %406 = vrot.lane.b32.xlu0 %v404, 64
  %v407 = vpop.permute.xlu0 %406
  %v409 = vmul.f32 %v391, %v407
  %v410 = vpack.c.bf16 %v409, %v409
  %412 = vrot.lane.b32.xlu0 %v410, 32
  %v413 = vpop.permute.xlu0 %412
  %v415 = vsel %vm193, %v413, 0
  %417 = vmatprep.subr.bf16.mxu0 0
  %418 = vmatpush1.bf16.msra.mxu0 %v17
  %419 = vmatprep.subr.bf16.mxu0 0
  %420 = vmatpush1.bf16.msra.mxu0 %v18
  %421 = vmatprep.subr.bf16.mxu0 0
  %422 = vmatpush1.bf16.msra.mxu0 0
  %423 = vmatprep.subr.bf16.mxu0 0
  %424 = vmatpush1.bf16.msra.mxu0 0
  %425 = vmatprep.subr.bf16.mxu0 0
  %426 = vmatpush1.bf16.msra.mxu0 0
  %427 = vmatprep.subr.bf16.mxu0 0
  %428 = vmatpush1.bf16.msra.mxu0 0
  %429 = vmatprep.subr.bf16.mxu0 0
  %430 = vmatpush1.bf16.msra.mxu0 0
  %431 = vmatprep.subr.bf16.mxu0 0
  %432 = vmatpush1.bf16.msra.mxu0 0
  %433 = vmatprep.subr.bf16.mxu0 0
  %434 = vmatpush1.bf16.msra.mxu0 0
  %435 = vmatprep.subr.bf16.mxu0 0
  %436 = vmatpush1.bf16.msra.mxu0 0
  %437 = vmatprep.subr.bf16.mxu0 0
  %438 = vmatpush1.bf16.msra.mxu0 0
  %439 = vmatprep.subr.bf16.mxu0 0
  %440 = vmatpush1.bf16.msra.mxu0 0
  %441 = vmatprep.subr.bf16.mxu0 0
  %442 = vmatpush1.bf16.msra.mxu0 0
  %443 = vmatprep.subr.bf16.mxu0 0
  %444 = vmatpush1.bf16.msra.mxu0 0
  %445 = vmatprep.subr.bf16.mxu0 0
  %446 = vmatpush1.bf16.msra.mxu0 0
  %447 = vmatprep.subr.bf16.mxu0 0
  %448 = vmatpush1.bf16.msra.mxu0 0
  %449 = vmatprep.mubr.bf16.mxu0 0
  %450 = vmatmul.mubr.bf16.gmra.mrb[0].mxu0 %v415
  %v451 = vpop.f32.mrb[0].mxu0
  %v452 = vadd.f32 0.0, %v451
  %v453 = vpop.f32.mrb[0].mxu0
  %v454 = vpop.f32.mrb[0].mxu0
  %v455 = vpop.f32.mrb[0].mxu0
  %456 = vdwg.mxu0
  %v457 = vadd.f32 %v153, %v452
  %v458 = vxor.u32 %v457, 2147483648
  %v459 = vmul.f32 %v458, 1.442695
  %v460 = vpow.pop %v459
  %v461 = vadd.f32 %v460, 1.0
  %v462 = vrcp.pop %v461
  %v463 = vmul.f32 1.0, %v462
  %v464 = vtanh.pop %v457
  %v465 = vmul.f32 %v463, %v403
  %467 = vrot.lane.b32.xlu0 %v464, 64
  %v468 = vpop.permute.xlu0 %467
  %v470 = vmul.f32 %v463, %v468
  %472 = vrot.lane.b32.xlu0 %v470, 32
  %v473 = vpop.permute.xlu0 %472
  %v475 = vadd.f32 %v465, %v473
  %v476 = vtanh.pop %v475
  %478 = vrot.lane.b32.xlu0 %v476, 64
  %v479 = vpop.permute.xlu0 %478
  %v481 = vmul.f32 %v463, %v479
  %v482 = vpack.c.bf16 %v481, %v481
  %484 = vrot.lane.b32.xlu0 %v482, 32
  %v485 = vpop.permute.xlu0 %484
  %v487 = vsel %vm193, %v485, 0
  %489 = vmatprep.subr.bf16.mxu0 0
  %490 = vmatpush1.bf16.msra.mxu0 %v17
  %491 = vmatprep.subr.bf16.mxu0 0
  %492 = vmatpush1.bf16.msra.mxu0 %v18
  %493 = vmatprep.subr.bf16.mxu0 0
  %494 = vmatpush1.bf16.msra.mxu0 0
  %495 = vmatprep.subr.bf16.mxu0 0
  %496 = vmatpush1.bf16.msra.mxu0 0
  %497 = vmatprep.subr.bf16.mxu0 0
  %498 = vmatpush1.bf16.msra.mxu0 0
  %499 = vmatprep.subr.bf16.mxu0 0
  %500 = vmatpush1.bf16.msra.mxu0 0
  %501 = vmatprep.subr.bf16.mxu0 0
  %502 = vmatpush1.bf16.msra.mxu0 0
  %503 = vmatprep.subr.bf16.mxu0 0
  %504 = vmatpush1.bf16.msra.mxu0 0
  %505 = vmatprep.subr.bf16.mxu0 0
  %506 = vmatpush1.bf16.msra.mxu0 0
  %507 = vmatprep.subr.bf16.mxu0 0
  %508 = vmatpush1.bf16.msra.mxu0 0
  %509 = vmatprep.subr.bf16.mxu0 0
  %510 = vmatpush1.bf16.msra.mxu0 0
  %511 = vmatprep.subr.bf16.mxu0 0
  %512 = vmatpush1.bf16.msra.mxu0 0
  %513 = vmatprep.subr.bf16.mxu0 0
  %514 = vmatpush1.bf16.msra.mxu0 0
  %515 = vmatprep.subr.bf16.mxu0 0
  %516 = vmatpush1.bf16.msra.mxu0 0
  %517 = vmatprep.subr.bf16.mxu0 0
  %518 = vmatpush1.bf16.msra.mxu0 0
  %519 = vmatprep.subr.bf16.mxu0 0
  %520 = vmatpush1.bf16.msra.mxu0 0
  %521 = vmatprep.mubr.bf16.mxu0 0
  %522 = vmatmul.mubr.bf16.gmra.mrb[0].mxu0 %v487
  %v523 = vpop.f32.mrb[0].mxu0
  %v524 = vadd.f32 0.0, %v523
  %v525 = vpop.f32.mrb[0].mxu0
  %v526 = vpop.f32.mrb[0].mxu0
  %v527 = vpop.f32.mrb[0].mxu0
  %528 = vdwg.mxu0
  %v529 = vadd.f32 %v158, %v524
  %v530 = vxor.u32 %v529, 2147483648
  %v531 = vmul.f32 %v530, 1.442695
  %v532 = vpow.pop %v531
  %v533 = vadd.f32 %v532, 1.0
  %v534 = vrcp.pop %v533
  %v535 = vmul.f32 1.0, %v534
  %v536 = vtanh.pop %v529
  %v537 = vmul.f32 %v535, %v475
  %539 = vrot.lane.b32.xlu0 %v536, 64
  %v540 = vpop.permute.xlu0 %539
  %v542 = vmul.f32 %v535, %v540
  %544 = vrot.lane.b32.xlu0 %v542, 32
  %v545 = vpop.permute.xlu0 %544
  %v547 = vadd.f32 %v537, %v545
  %v548 = vtanh.pop %v547
  %550 = vrot.lane.b32.xlu0 %v548, 64
  %v551 = vpop.permute.xlu0 %550
  %v553 = vmul.f32 %v535, %v551
  %v554 = vpack.c.bf16 %v553, %v553
  %556 = vrot.lane.b32.xlu0 %v554, 32
  %v557 = vpop.permute.xlu0 %556
  %v559 = vsel %vm193, %v557, 0
  %561 = vmatprep.subr.bf16.mxu0 0
  %562 = vmatpush1.bf16.msra.mxu0 %v17
  %563 = vmatprep.subr.bf16.mxu0 0
  %564 = vmatpush1.bf16.msra.mxu0 %v18
  %565 = vmatprep.subr.bf16.mxu0 0
  %566 = vmatpush1.bf16.msra.mxu0 0
  %567 = vmatprep.subr.bf16.mxu0 0
  %568 = vmatpush1.bf16.msra.mxu0 0
  %569 = vmatprep.subr.bf16.mxu0 0
  %570 = vmatpush1.bf16.msra.mxu0 0
  %571 = vmatprep.subr.bf16.mxu0 0
  %572 = vmatpush1.bf16.msra.mxu0 0
  %573 = vmatprep.subr.bf16.mxu0 0
  %574 = vmatpush1.bf16.msra.mxu0 0
  %575 = vmatprep.subr.bf16.mxu0 0
  %576 = vmatpush1.bf16.msra.mxu0 0
  %577 = vmatprep.subr.bf16.mxu0 0
  %578 = vmatpush1.bf16.msra.mxu0 0
  %579 = vmatprep.subr.bf16.mxu0 0
  %580 = vmatpush1.bf16.msra.mxu0 0
  %581 = vmatprep.subr.bf16.mxu0 0
  %582 = vmatpush1.bf16.msra.mxu0 0
  %583 = vmatprep.subr.bf16.mxu0 0
  %584 = vmatpush1.bf16.msra.mxu0 0
  %585 = vmatprep.subr.bf16.mxu0 0
  %586 = vmatpush1.bf16.msra.mxu0 0
  %587 = vmatprep.subr.bf16.mxu0 0
  %588 = vmatpush1.bf16.msra.mxu0 0
  %589 = vmatprep.subr.bf16.mxu0 0
  %590 = vmatpush1.bf16.msra.mxu0 0
  %591 = vmatprep.subr.bf16.mxu0 0
  %592 = vmatpush1.bf16.msra.mxu0 0
  %593 = vmatprep.mubr.bf16.mxu0 0
  %594 = vmatmul.mubr.bf16.gmra.mrb[0].mxu0 %v559
  %v595 = vpop.f32.mrb[0].mxu0
  %v596 = vadd.f32 0.0, %v595
  %v597 = vpop.f32.mrb[0].mxu0
  %v598 = vpop.f32.mrb[0].mxu0
  %v599 = vpop.f32.mrb[0].mxu0
  %600 = vdwg.mxu0
  %v601 = vadd.f32 %v163, %v596
  %v602 = vxor.u32 %v601, 2147483648
  %v603 = vmul.f32 %v602, 1.442695
  %v604 = vpow.pop %v603
  %v605 = vadd.f32 %v604, 1.0
  %v606 = vrcp.pop %v605
  %v607 = vmul.f32 1.0, %v606
  %v608 = vtanh.pop %v601
  %v609 = vmul.f32 %v607, %v547
  %611 = vrot.lane.b32.xlu0 %v608, 64
  %v612 = vpop.permute.xlu0 %611
  %v614 = vmul.f32 %v607, %v612
  %616 = vrot.lane.b32.xlu0 %v614, 32
  %v617 = vpop.permute.xlu0 %616
  %v619 = vadd.f32 %v609, %v617
  %v620 = vtanh.pop %v619
  %622 = vrot.lane.b32.xlu0 %v620, 64
  %v623 = vpop.permute.xlu0 %622
  %v625 = vmul.f32 %v607, %v623
  %v626 = vpack.c.bf16 %v625, %v625
  %628 = vrot.lane.b32.xlu0 %v626, 32
  %v629 = vpop.permute.xlu0 %628
  %v631 = vsel %vm193, %v629, 0
  %633 = vmatprep.subr.bf16.mxu0 0
  %634 = vmatpush1.bf16.msra.mxu0 %v17
  %635 = vmatprep.subr.bf16.mxu0 0
  %636 = vmatpush1.bf16.msra.mxu0 %v18
  %637 = vmatprep.subr.bf16.mxu0 0
  %638 = vmatpush1.bf16.msra.mxu0 0
  %639 = vmatprep.subr.bf16.mxu0 0
  %640 = vmatpush1.bf16.msra.mxu0 0
  %641 = vmatprep.subr.bf16.mxu0 0
  %642 = vmatpush1.bf16.msra.mxu0 0
  %643 = vmatprep.subr.bf16.mxu0 0
  %644 = vmatpush1.bf16.msra.mxu0 0
  %645 = vmatprep.subr.bf16.mxu0 0
  %646 = vmatpush1.bf16.msra.mxu0 0
  %647 = vmatprep.subr.bf16.mxu0 0
  %648 = vmatpush1.bf16.msra.mxu0 0
  %649 = vmatprep.subr.bf16.mxu0 0
  %650 = vmatpush1.bf16.msra.mxu0 0
  %651 = vmatprep.subr.bf16.mxu0 0
  %652 = vmatpush1.bf16.msra.mxu0 0
  %653 = vmatprep.subr.bf16.mxu0 0
  %654 = vmatpush1.bf16.msra.mxu0 0
  %655 = vmatprep.subr.bf16.mxu0 0
  %656 = vmatpush1.bf16.msra.mxu0 0
  %657 = vmatprep.subr.bf16.mxu0 0
  %658 = vmatpush1.bf16.msra.mxu0 0
  %659 = vmatprep.subr.bf16.mxu0 0
  %660 = vmatpush1.bf16.msra.mxu0 0
  %661 = vmatprep.subr.bf16.mxu0 0
  %662 = vmatpush1.bf16.msra.mxu0 0
  %663 = vmatprep.subr.bf16.mxu0 0
  %664 = vmatpush1.bf16.msra.mxu0 0
  %665 = vmatprep.mubr.bf16.mxu0 0
  %666 = vmatmul.mubr.bf16.gmra.mrb[0].mxu0 %v631
  %v667 = vpop.f32.mrb[0].mxu0
  %v668 = vadd.f32 0.0, %v667
  %v669 = vpop.f32.mrb[0].mxu0
  %v670 = vpop.f32.mrb[0].mxu0
  %v671 = vpop.f32.mrb[0].mxu0
  %672 = vdwg.mxu0
  %v673 = vadd.f32 %v168, %v668
  %v674 = vxor.u32 %v673, 2147483648
  %v675 = vmul.f32 %v674, 1.442695
  %v676 = vpow.pop %v675
  %v677 = vadd.f32 %v676, 1.0
  %v678 = vrcp.pop %v677
  %v679 = vmul.f32 1.0, %v678
  %v680 = vtanh.pop %v673
  %v681 = vmul.f32 %v679, %v619
  %683 = vrot.lane.b32.xlu0 %v680, 64
  %v684 = vpop.permute.xlu0 %683
  %v686 = vmul.f32 %v679, %v684
  %688 = vrot.lane.b32.xlu0 %v686, 32
  %v689 = vpop.permute.xlu0 %688
  %v691 = vadd.f32 %v681, %v689
  %v692 = vtanh.pop %v691
  %694 = vrot.lane.b32.xlu0 %v692, 64
  %v695 = vpop.permute.xlu0 %694
  %v697 = vmul.f32 %v679, %v695
  %v698 = vlaneseq
  %v699 = vshrl.u32 %v698, 7
  %v700 = vsub.s32 0, %v699
  %v701 = vrot.slane %v24, %v700
  %703 = vrot.lane.b32.xlu0 %v697, 32
  %v704 = vpop.permute.xlu0 %703
  %v705 = vsel %vm193, %v704, 0
  %707 = vmatprep.subr.mxu0 0.0
  %708 = vmatpush1.msra.mxu0 %v20
  %709 = vmatprep.subr.mxu0 0.0
  %710 = vmatpush1.msra.mxu0 %v21
  %711 = vmatprep.subr.mxu0 0.0
  %712 = vmatpush1.msra.mxu0 %v22
  %713 = vmatprep.subr.mxu0 0.0
  %714 = vmatpush1.msra.mxu0 %v23
  %715 = vmatprep.subr.mxu0 0.0
  %716 = vmatpush1.msra.mxu0 0.0
  %717 = vmatprep.subr.mxu0 0.0
  %718 = vmatpush1.msra.mxu0 0.0
  %719 = vmatprep.subr.mxu0 0.0
  %720 = vmatpush1.msra.mxu0 0.0
  %721 = vmatprep.subr.mxu0 0.0
  %722 = vmatpush1.msra.mxu0 0.0
  %723 = vmatprep.subr.mxu0 0.0
  %724 = vmatpush1.msra.mxu0 0.0
  %725 = vmatprep.subr.mxu0 0.0
  %726 = vmatpush1.msra.mxu0 0.0
  %727 = vmatprep.subr.mxu0 0.0
  %728 = vmatpush1.msra.mxu0 0.0
  %729 = vmatprep.subr.mxu0 0.0
  %730 = vmatpush1.msra.mxu0 0.0
  %731 = vmatprep.subr.mxu0 0.0
  %732 = vmatpush1.msra.mxu0 0.0
  %733 = vmatprep.subr.mxu0 0.0
  %734 = vmatpush1.msra.mxu0 0.0
  %735 = vmatprep.subr.mxu0 0.0
  %736 = vmatpush1.msra.mxu0 0.0
  %737 = vmatprep.subr.mxu0 0.0
  %738 = vmatpush1.msra.mxu0 0.0
  %739 = vmatprep.subr.mxu0 0.0
  %740 = vmatpush1.msra.mxu0 0.0
  %741 = vmatprep.subr.mxu0 0.0
  %742 = vmatpush1.msra.mxu0 0.0
  %743 = vmatprep.subr.mxu0 0.0
  %744 = vmatpush1.msra.mxu0 0.0
  %745 = vmatprep.subr.mxu0 0.0
  %746 = vmatpush1.msra.mxu0 0.0
  %747 = vmatprep.subr.mxu0 0.0
  %748 = vmatpush1.msra.mxu0 0.0
  %749 = vmatprep.subr.mxu0 0.0
  %750 = vmatpush1.msra.mxu0 0.0
  %751 = vmatprep.subr.mxu0 0.0
  %752 = vmatpush1.msra.mxu0 0.0
  %753 = vmatprep.subr.mxu0 0.0
  %754 = vmatpush1.msra.mxu0 0.0
  %755 = vmatprep.subr.mxu0 0.0
  %756 = vmatpush1.msra.mxu0 0.0
  %757 = vmatprep.subr.mxu0 0.0
  %758 = vmatpush1.msra.mxu0 0.0
  %759 = vmatprep.subr.mxu0 0.0
  %760 = vmatpush1.msra.mxu0 0.0
  %761 = vmatprep.subr.mxu0 0.0
  %762 = vmatpush1.msra.mxu0 0.0
  %763 = vmatprep.subr.mxu0 0.0
  %764 = vmatpush1.msra.mxu0 0.0
  %765 = vmatprep.subr.mxu0 0.0
  %766 = vmatpush1.msra.mxu0 0.0
  %767 = vmatprep.subr.mxu0 0.0
  %768 = vmatpush1.msra.mxu0 0.0
  %769 = vmatprep.subr.mxu0 0.0
  %770 = vmatpush1.msra.mxu0 0.0
  %771 = vmatprep.mubr.f32.mxu0 0.0
  %772 = vmatmul.mubr.f32.gmra.mrb[0].mxu0 %v705
  %v773 = vpop.f32.mrb[0].mxu0
  %v774 = vadd.f32 %v701, %v773
  %v775 = vpop.f32.mrb[0].mxu0
  %776 = vdwg.mxu0
  %777 = vst [vmem:[%s2] sm:$0xff] %v774
  // Predicated region
  $region10: #{acao_model_forward.1} parent=0 // pred_check
    _
  $region11: #{acao_model_forward.1} parent=0 // pred_check_branch
    %779 = sbr.rel (0) target = $region13
  $region12: #{acao_model_forward.1} parent=0 // pred_region
    _
  $region13: #{acao_model_forward.1} parent=0 // pred_fallthru
    _
  // Predicated region
  $region14: #{acao_model_forward.1} parent=0 // pred_check
    _
  $region15: #{acao_model_forward.1} parent=0 // pred_check_branch
    %781 = sbr.rel (0) target = $region17
  $region16: #{acao_model_forward.1} parent=0 // pred_region
    _
  $region17: #{acao_model_forward.1} parent=0 // pred_fallthru
    _

</llo_original>
